<compile_context>
chip_gen: v6e
topology: v6e:2x2x1
jax: 0.10.0
libtpu: 0.0.40
codegen_flags: <defaults>
</compile_context>

<pallas_src>
import jax
import jax.numpy as jnp
from jax.experimental import pallas as pl
from jax.experimental.pallas import tpu as pltpu

NEG_SLOPE = 0.01  # nn.LeakyReLU() default negative_slope
LANE = 128        # TPU lane width; batch tiles must be a multiple of this


def _leaky_relu(x):
    return jnp.where(x > 0, x, NEG_SLOPE * x)


def _round_up(n, m):
    return ((n + m - 1) // m) * m


def mlp_kernel(xT_ref, w1_ref, b1_ref, w2_ref, b2_ref, w3_ref, b3_ref, oT_ref):
    """Transposed MLP: all operands are (features, batch_tile); batch on lanes."""
    # Layer 1: W1 @ x^T + b1, LeakyReLU
    h = jnp.dot(w1_ref[...], xT_ref[...], preferred_element_type=jnp.float32)
    h = _leaky_relu(h + b1_ref[...])
    # Layer 2: W2 @ h + b2, LeakyReLU
    h = jnp.dot(w2_ref[...], h, preferred_element_type=jnp.float32)
    h = _leaky_relu(h + b2_ref[...])
    # Output layer: W3 @ h + b3 (no activation, out_act=None)
    o = jnp.dot(w3_ref[...], h, preferred_element_type=jnp.float32) + b3_ref[...]
    oT_ref[...] = o.astype(oT_ref.dtype)


def simple_nn_forward(x, params, tb=1024):
    """x: (batch, in_dim) f32. params: torch-layout weights (out,in), biases (out,1)."""
    w1, b1, w2, b2, w3, b3 = (
        params["w1"], params["b1"], params["w2"],
        params["b2"], params["w3"], params["b3"],
    )
    batch, in_dim = x.shape
    out_dim = w3.shape[0]

    # Pick a lane-aligned batch tile: multiple of 128, no bigger than needed.
    tb = min(_round_up(tb, LANE), _round_up(batch, LANE))
    padded = _round_up(batch, tb)
    n_tiles = padded // tb

    # Present data transposed so batch sits on the 128-lane axis; pad batch.
    xT = jnp.transpose(x)
    if padded != batch:
        xT = jnp.pad(xT, ((0, 0), (0, padded - batch)))

    const = lambda i: (0, 0)          # weights/biases: VMEM-resident every step
    tile = lambda i: (0, i)           # x / out: walk batch tiles along lanes

    yT = pl.pallas_call(
        mlp_kernel,
        out_shape=jax.ShapeDtypeStruct((out_dim, padded), jnp.float32),
        grid=(n_tiles,),
        in_specs=[
            pl.BlockSpec((in_dim, tb), tile),      # x^T tile (lane-dense)
            pl.BlockSpec(w1.shape, const),         # (20, in_dim)
            pl.BlockSpec(b1.shape, const),         # (20, 1)
            pl.BlockSpec(w2.shape, const),         # (20, 20)
            pl.BlockSpec(b2.shape, const),         # (20, 1)
            pl.BlockSpec(w3.shape, const),         # (out_dim, 20)
            pl.BlockSpec(b3.shape, const),         # (out_dim, 1)
        ],
        out_specs=pl.BlockSpec((out_dim, tb), tile),   # y^T tile (lane-dense)
        compiler_params=pltpu.CompilerParams(
            dimension_semantics=("parallel",)),        # shard tiles on v7x's 2 TCs
    )(xT, w1, b1, w2, b2, w3, b3)

    return jnp.transpose(yT[:, :batch])


def init_params(key, in_dim, out_dim, n_layers=(20, 20)):
    """Deterministic init matching reset_parameters(): uniform(-1e-4, 1e-4).

    Weights kept in torch layout (out_features, in_features); biases as
    (out_features, 1) columns for lane-broadcast in the transposed kernel.
    """
    dims = [in_dim, *n_layers, out_dim]
    params = {}
    keys = jax.random.split(key, 2 * (len(dims) - 1))
    for i in range(len(dims) - 1):
        fan_in, fan_out = dims[i], dims[i + 1]
        params[f"w{i+1}"] = jax.random.uniform(
            keys[2 * i], (fan_out, fan_in), jnp.float32, -1e-4, 1e-4)
        params[f"b{i+1}"] = jax.random.uniform(
            keys[2 * i + 1], (fan_out, 1), jnp.float32, -1e-4, 1e-4)
    return params


def reference_forward(x, params):
    """Pure-JAX reference of the same forward pass (standard row-major layout)."""
    h = x @ params["w1"].T + params["b1"].T
    h = jnp.where(h > 0, h, NEG_SLOPE * h)
    h = h @ params["w2"].T + params["b2"].T
    h = jnp.where(h > 0, h, NEG_SLOPE * h)
    return h @ params["w3"].T + params["b3"].T


if __name__ == "__main__":
    in_dim, out_dim, batch = 4, 2, 8

    key = jax.random.PRNGKey(0)
    pkey, xkey = jax.random.split(key)
    params = init_params(pkey, in_dim, out_dim, n_layers=(20, 20))
    x = jax.random.normal(xkey, (batch, in_dim), jnp.float32)

    y = simple_nn_forward(x, params)
    y = jax.block_until_ready(y)

    y_ref = reference_forward(x, params)
    assert y.shape == (batch, out_dim)
    assert jnp.allclose(y, y_ref, atol=1e-6, rtol=1e-5)

    print("KERNEL_OK")
</pallas_src>

<mosaic_0001>
module attributes {stable_mosaic.version = 11 : i64} {
  func.func @mlp_kernel(%arg0: i32, %arg1: memref<4x128xf32, #tpu.memory_space<vmem>>, %arg2: memref<20x4xf32, #tpu.memory_space<vmem>>, %arg3: memref<20x1xf32, #tpu.memory_space<vmem>>, %arg4: memref<20x20xf32, #tpu.memory_space<vmem>>, %arg5: memref<20x1xf32, #tpu.memory_space<vmem>>, %arg6: memref<2x20xf32, #tpu.memory_space<vmem>>, %arg7: memref<2x1xf32, #tpu.memory_space<vmem>>, %arg8: memref<2x128xf32, #tpu.memory_space<vmem>>) attributes {dimension_semantics = [#tpu.dimension_semantics<parallel>], iteration_bounds = array<i64: 1>, scalar_prefetch = 0 : i64, scratch_operands = 0 : i64, tpu.core_type = #tpu.core_type<tc>, window_params = [{transform_indices = @transform_0, window_bounds = array<i64: 4, 128>}, {pipeline_mode = #tpu.pipeline_mode<synchronous>, transform_indices = @transform_1, window_bounds = array<i64: 20, 4>}, {pipeline_mode = #tpu.pipeline_mode<synchronous>, transform_indices = @transform_2, window_bounds = array<i64: 20, 1>}, {pipeline_mode = #tpu.pipeline_mode<synchronous>, transform_indices = @transform_3, window_bounds = array<i64: 20, 20>}, {pipeline_mode = #tpu.pipeline_mode<synchronous>, transform_indices = @transform_4, window_bounds = array<i64: 20, 1>}, {pipeline_mode = #tpu.pipeline_mode<synchronous>, transform_indices = @transform_5, window_bounds = array<i64: 2, 20>}, {pipeline_mode = #tpu.pipeline_mode<synchronous>, transform_indices = @transform_6, window_bounds = array<i64: 2, 1>}, {transform_indices = @transform_7, window_bounds = array<i64: 2, 128>}]} {
    %c0 = arith.constant 0 : index
    %c0_0 = arith.constant 0 : index
    %0 = vector.load %arg2[%c0, %c0_0] : memref<20x4xf32, #tpu.memory_space<vmem>>, vector<20x4xf32>
    %c0_1 = arith.constant 0 : index
    %c0_2 = arith.constant 0 : index
    %1 = vector.load %arg1[%c0_1, %c0_2] : memref<4x128xf32, #tpu.memory_space<vmem>>, vector<4x128xf32>
    %cst = arith.constant dense<0.000000e+00> : vector<20x128xf32>
    %2 = tpu.matmul %0, %1, %cst {dimension_numbers = #tpu.dot_dimension_numbers<[1], [0], [0], [1], [0, 0, 1, 1], [], []>} : vector<20x4xf32>, vector<4x128xf32>, vector<20x128xf32> -> vector<20x128xf32>
    %c0_3 = arith.constant 0 : index
    %c0_4 = arith.constant 0 : index
    %3 = vector.load %arg3[%c0_3, %c0_4] : memref<20x1xf32, #tpu.memory_space<vmem>>, vector<20x1xf32>
    %4 = vector.broadcast %3 : vector<20x1xf32> to vector<20x128xf32>
    %5 = arith.addf %2, %4 : vector<20x128xf32>
    %cst_5 = arith.constant 0.000000e+00 : f32
    %6 = vector.broadcast %cst_5 : f32 to vector<20x128xf32>
    %7 = arith.cmpf ogt, %5, %6 : vector<20x128xf32>
    %cst_6 = arith.constant 0.00999999977 : f32
    %8 = vector.broadcast %cst_6 : f32 to vector<20x128xf32>
    %9 = arith.mulf %8, %5 : vector<20x128xf32>
    %10 = arith.select %7, %5, %9 : vector<20x128xi1>, vector<20x128xf32>
    %c0_7 = arith.constant 0 : index
    %c0_8 = arith.constant 0 : index
    %11 = vector.load %arg4[%c0_7, %c0_8] : memref<20x20xf32, #tpu.memory_space<vmem>>, vector<20x20xf32>
    %cst_9 = arith.constant dense<0.000000e+00> : vector<20x128xf32>
    %12 = tpu.matmul %11, %10, %cst_9 {dimension_numbers = #tpu.dot_dimension_numbers<[1], [0], [0], [1], [0, 0, 1, 1], [], []>} : vector<20x20xf32>, vector<20x128xf32>, vector<20x128xf32> -> vector<20x128xf32>
    %c0_10 = arith.constant 0 : index
    %c0_11 = arith.constant 0 : index
    %13 = vector.load %arg5[%c0_10, %c0_11] : memref<20x1xf32, #tpu.memory_space<vmem>>, vector<20x1xf32>
    %14 = vector.broadcast %13 : vector<20x1xf32> to vector<20x128xf32>
    %15 = arith.addf %12, %14 : vector<20x128xf32>
    %cst_12 = arith.constant 0.000000e+00 : f32
    %16 = vector.broadcast %cst_12 : f32 to vector<20x128xf32>
    %17 = arith.cmpf ogt, %15, %16 : vector<20x128xf32>
    %cst_13 = arith.constant 0.00999999977 : f32
    %18 = vector.broadcast %cst_13 : f32 to vector<20x128xf32>
    %19 = arith.mulf %18, %15 : vector<20x128xf32>
    %20 = arith.select %17, %15, %19 : vector<20x128xi1>, vector<20x128xf32>
    %c0_14 = arith.constant 0 : index
    %c0_15 = arith.constant 0 : index
    %21 = vector.load %arg6[%c0_14, %c0_15] : memref<2x20xf32, #tpu.memory_space<vmem>>, vector<2x20xf32>
    %cst_16 = arith.constant dense<0.000000e+00> : vector<2x128xf32>
    %22 = tpu.matmul %21, %20, %cst_16 {dimension_numbers = #tpu.dot_dimension_numbers<[1], [0], [0], [1], [0, 0, 1, 1], [], []>} : vector<2x20xf32>, vector<20x128xf32>, vector<2x128xf32> -> vector<2x128xf32>
    %c0_17 = arith.constant 0 : index
    %c0_18 = arith.constant 0 : index
    %23 = vector.load %arg7[%c0_17, %c0_18] : memref<2x1xf32, #tpu.memory_space<vmem>>, vector<2x1xf32>
    %24 = vector.broadcast %23 : vector<2x1xf32> to vector<2x128xf32>
    %25 = arith.addf %22, %24 : vector<2x128xf32>
    %c0_19 = arith.constant 0 : index
    %c0_20 = arith.constant 0 : index
    %26 = vector.load %arg8[%c0_19, %c0_20] : memref<2x128xf32, #tpu.memory_space<vmem>>, vector<2x128xf32>
    tpu.vector_store %arg8[%c0_19, %c0_20], %25 {strides = array<i32>} : memref<2x128xf32, #tpu.memory_space<vmem>>, vector<2x128xf32>,
    return
  }
  func.func @transform_0(%arg0: i32) -> (i32, i32) {
    %c0_i32 = arith.constant 0 : i32
    %c0_i32_0 = arith.constant 0 : i32
    return %c0_i32, %arg0 : i32, i32
  }
  func.func @transform_1(%arg0: i32) -> (i32, i32) {
    %c0_i32 = arith.constant 0 : i32
    %c0_i32_0 = arith.constant 0 : i32
    %c0_i32_1 = arith.constant 0 : i32
    return %c0_i32, %c0_i32_0 : i32, i32
  }
  func.func @transform_2(%arg0: i32) -> (i32, i32) {
    %c0_i32 = arith.constant 0 : i32
    %c0_i32_0 = arith.constant 0 : i32
    %c0_i32_1 = arith.constant 0 : i32
    return %c0_i32, %c0_i32_0 : i32, i32
  }
  func.func @transform_3(%arg0: i32) -> (i32, i32) {
    %c0_i32 = arith.constant 0 : i32
    %c0_i32_0 = arith.constant 0 : i32
    %c0_i32_1 = arith.constant 0 : i32
    return %c0_i32, %c0_i32_0 : i32, i32
  }
  func.func @transform_4(%arg0: i32) -> (i32, i32) {
    %c0_i32 = arith.constant 0 : i32
    %c0_i32_0 = arith.constant 0 : i32
    %c0_i32_1 = arith.constant 0 : i32
    return %c0_i32, %c0_i32_0 : i32, i32
  }
  func.func @transform_5(%arg0: i32) -> (i32, i32) {
    %c0_i32 = arith.constant 0 : i32
    %c0_i32_0 = arith.constant 0 : i32
    %c0_i32_1 = arith.constant 0 : i32
    return %c0_i32, %c0_i32_0 : i32, i32
  }
  func.func @transform_6(%arg0: i32) -> (i32, i32) {
    %c0_i32 = arith.constant 0 : i32
    %c0_i32_0 = arith.constant 0 : i32
    %c0_i32_1 = arith.constant 0 : i32
    return %c0_i32, %c0_i32_0 : i32, i32
  }
  func.func @transform_7(%arg0: i32) -> (i32, i32) {
    %c0_i32 = arith.constant 0 : i32
    %c0_i32_0 = arith.constant 0 : i32
    return %c0_i32, %arg0 : i32, i32
  }
}

</mosaic_0001>

<llo_original>
// kernel: tpu_custom_call.1
$region0: #{tpu_custom_call.1}
  #allocation0 [shape = 'u32[]', space=smem, size = 0x4, offset = 0x4, fixed_abs, tag = 'smem constant byte address 0x4 - core index']
  #allocation1 [shape = 'u32[144,128]{1,0:T(1,128)}', space=vmem, size = 0x12000, scoped, tag = 'internal scratch']
  %s0 = inlined_call_operand.vmem [shape: f32[4,128], index: 0, kind: input, shape index: {}]
  %s1 = inlined_call_operand.vmem [shape: f32[20,4], index: 1, kind: input, shape index: {}]
  %s2 = inlined_call_operand.vmem [shape: f32[20,1], index: 2, kind: input, shape index: {}]
  %s3 = inlined_call_operand.vmem [shape: f32[20,20], index: 3, kind: input, shape index: {}]
  %s4 = inlined_call_operand.vmem [shape: f32[20,1], index: 4, kind: input, shape index: {}]
  %s5 = inlined_call_operand.vmem [shape: f32[2,20], index: 5, kind: input, shape index: {}]
  %s6 = inlined_call_operand.vmem [shape: f32[2,1], index: 6, kind: input, shape index: {}]
  %s7 = inlined_call_operand.hbm [shape: f32[2,128], index: 7, kind: output, shape index: {}]
  %s8 = sld [smem:[#allocation0]]
  $region38: #{tpu_custom_call.1} parent=0
    _
  %s10 = ssub.s32 1, %s8
  %s11 = scalar_select 0, %s10, %s8
  $region1: #{tpu_custom_call.1} parent=0
    #allocation2 [shape = 'u8[1024]{0}', space=vmem, size = 0x400, scoped, tag = 'output window, operand 0, single buffered']
    #allocation3 [shape = 's32[1]{0}', space=sflag, size = 0x4, scoped, tag = 'scoped memory for tpu_custom_call.1']
    %12 = vsyncpa [#allocation3], 0
    // Predicated region
    $region2: #{tpu_custom_call.1} parent=1 // pred_check
      _
    $region3: #{tpu_custom_call.1} parent=1 // pred_check_branch
      %14 = sbr.rel (0) target = $region5
    $region4: #{tpu_custom_call.1} parent=1 // pred_region
      _
    $region5: #{tpu_custom_call.1} parent=1 // pred_fallthru
      _
    // Predicated region
    $region6: #{tpu_custom_call.1} parent=1 // pred_check
      _
    $region7: #{tpu_custom_call.1} parent=1 // pred_check_branch
      %16 = sbr.rel (0) target = $region9
    $region8: #{tpu_custom_call.1} parent=1 // pred_region
      _
    $region9: #{tpu_custom_call.1} parent=1 // pred_fallthru
      _
    // Predicated region
    $region10: #{tpu_custom_call.1} parent=1 // pred_check
      _
    $region11: #{tpu_custom_call.1} parent=1 // pred_check_branch
      %18 = sbr.rel (0) target = $region13
    $region12: #{tpu_custom_call.1} parent=1 // pred_region
      _
    $region13: #{tpu_custom_call.1} parent=1 // pred_fallthru
      _
    // Predicated region
    $region14: #{tpu_custom_call.1} parent=1 // pred_check
      _
    $region15: #{tpu_custom_call.1} parent=1 // pred_check_branch
      %20 = sbr.rel (0) target = $region17
    $region16: #{tpu_custom_call.1} parent=1 // pred_region
      _
    $region17: #{tpu_custom_call.1} parent=1 // pred_fallthru
      _
    // Predicated region
    $region18: #{tpu_custom_call.1} parent=1 // pred_check
      _
    $region19: #{tpu_custom_call.1} parent=1 // pred_check_branch
      %22 = sbr.rel (0) target = $region21
    $region20: #{tpu_custom_call.1} parent=1 // pred_region
      _
    $region21: #{tpu_custom_call.1} parent=1 // pred_fallthru
      _
    // Predicated region
    $region22: #{tpu_custom_call.1} parent=1 // pred_check
      _
    $region23: #{tpu_custom_call.1} parent=1 // pred_check_branch
      %24 = sbr.rel (0) target = $region25
    $region24: #{tpu_custom_call.1} parent=1 // pred_region
      _
    $region25: #{tpu_custom_call.1} parent=1 // pred_fallthru
      _
    // Predicated region
    $region26: #{tpu_custom_call.1} parent=1 // pred_check
      _
    $region27: #{tpu_custom_call.1} parent=1 // pred_check_branch
      %26 = sbr.rel (0) target = $region29
    $region28: #{tpu_custom_call.1} parent=1 // pred_region
      _
    $region29: #{tpu_custom_call.1} parent=1 // pred_fallthru
      _
    %v27 = vld [vmem:[%s1] sm:$0xff]
    %v28 = vld [vmem:[%s1 + $0x8] sm:$0xff]
    %v29 = vld [vmem:[%s1 + $0x10] sm:$0xf]
    %v30 = vld [vmem:[%s0] sm:$0xf]
    %v31 = vld [vmem:[%s2] sm:$0xff]
    %v32 = vld [vmem:[%s2 + $0x8] sm:$0xff]
    %v33 = vld [vmem:[%s2 + $0x10] sm:$0xf]
    %35 = vset.pattern.permute.xlu0 0
    %36 = vperm.xlu0 %35, %v31
    %v37 = vpop.permute.xlu0 %36
    %40 = vset.pattern.permute.xlu0 0
    %41 = vperm.xlu0 %40, %v32
    %v42 = vpop.permute.xlu0 %41
    %45 = vset.pattern.permute.xlu0 0
    %46 = vperm.xlu0 %45, %v33
    %v47 = vpop.permute.xlu0 %46
    %vm49 = vcmask 31744
    %v51 = vsel %vm49, %v27, 0
    %v54 = vsel %vm49, %v28, 0
    %v57 = vsel %vm49, %v29, 0
    %vm59 = vcmask 1043456
    %v61 = vsel %vm59, %v30, 0
    %63 = vmatprep.subr.mxu0 0.0
    %64 = vmatpush1.msra.mxu0 0.0
    %65 = vmatprep.subr.mxu0 0.0
    %66 = vmatpush1.msra.mxu0 0.0
    %67 = vmatprep.subr.mxu0 0.0
    %68 = vmatpush1.msra.mxu0 0.0
    %69 = vmatprep.subr.mxu0 0.0
    %70 = vmatpush1.msra.mxu0 0.0
    %71 = vmatprep.subr.mxu0 0.0
    %72 = vmatpush1.msra.mxu0 0.0
    %73 = vmatprep.subr.mxu0 0.0
    %74 = vmatpush1.msra.mxu0 0.0
    %75 = vmatprep.subr.mxu0 0.0
    %76 = vmatpush1.msra.mxu0 0.0
    %77 = vmatprep.subr.mxu0 0.0
    %78 = vmatpush1.msra.mxu0 0.0
    %79 = vmatprep.subr.mxu0 0.0
    %80 = vmatpush1.msra.mxu0 0.0
    %81 = vmatprep.subr.mxu0 0.0
    %82 = vmatpush1.msra.mxu0 0.0
    %83 = vmatprep.subr.mxu0 0.0
    %84 = vmatpush1.msra.mxu0 0.0
    %85 = vmatprep.subr.mxu0 0.0
    %86 = vmatpush1.msra.mxu0 0.0
    %87 = vmatprep.subr.mxu0 0.0
    %88 = vmatpush1.msra.mxu0 0.0
    %89 = vmatprep.subr.mxu0 0.0
    %90 = vmatpush1.msra.mxu0 0.0
    %91 = vmatprep.subr.mxu0 0.0
    %92 = vmatpush1.msra.mxu0 0.0
    %93 = vmatprep.subr.mxu0 0.0
    %94 = vmatpush1.msra.mxu0 %v61
    %95 = vmatprep.subr.mxu0 0.0
    %96 = vmatpush2.msra.mxu0 0.0
    %97 = vmatprep.subr.mxu0 0.0
    %98 = vmatpush2.msra.mxu0 0.0
    %99 = vmatprep.subr.mxu0 0.0
    %100 = vmatpush2.msra.mxu0 0.0
    %101 = vmatprep.subr.mxu0 0.0
    %102 = vmatpush2.msra.mxu0 0.0
    %103 = vmatprep.subr.mxu0 0.0
    %104 = vmatpush2.msra.mxu0 0.0
    %105 = vmatprep.subr.mxu0 0.0
    %106 = vmatpush2.msra.mxu0 0.0
    %107 = vmatprep.subr.mxu0 0.0
    %108 = vmatpush2.msra.mxu0 0.0
    %109 = vmatprep.subr.mxu0 0.0
    %110 = vmatpush2.msra.mxu0 0.0
    %111 = vmatprep.subr.mxu0 0.0
    %112 = vmatpush2.msra.mxu0 0.0
    %113 = vmatprep.subr.mxu0 0.0
    %114 = vmatpush2.msra.mxu0 0.0
    %115 = vmatprep.subr.mxu0 0.0
    %116 = vmatpush2.msra.mxu0 0.0
    %117 = vmatprep.subr.mxu0 0.0
    %118 = vmatpush2.msra.mxu0 0.0
    %119 = vmatprep.subr.mxu0 0.0
    %120 = vmatpush2.msra.mxu0 0.0
    %121 = vmatprep.subr.mxu0 0.0
    %122 = vmatpush2.msra.mxu0 0.0
    %123 = vmatprep.subr.mxu0 0.0
    %124 = vmatpush2.msra.mxu0 0.0
    %125 = vmatprep.subr.mxu0 0.0
    %126 = vmatpush2.msra.mxu0 0.0
    %127 = vmatprep.mubr.f32.mxu0 0.0
    %128 = vmatmul.mubr.f32.gmra.mxu0 %v51
    %v129 = vpop.f32.mrf.mxu0
    %v130 = vadd.f32 %v37, %v129
    %v131 = vpop.f32.mrf.mxu0
    %132 = vmatprep.mubr.f32.mxu0 0.0
    %133 = vmatmul.mubr.f32.gmra.mxu0 %v54
    %v134 = vpop.f32.mrf.mxu0
    %v135 = vadd.f32 %v42, %v134
    %v136 = vpop.f32.mrf.mxu0
    %137 = vmatprep.mubr.f32.mxu0 0.0
    %138 = vmatmul.mubr.f32.gmra.mxu0 %v57
    %v139 = vpop.f32.mrf.mxu0
    %v140 = vadd.f32 %v47, %v139
    %v141 = vpop.f32.mrf.mxu0
    %142 = vdwg.mxu0
    %vm143 = vcmp.gt.f32.partialorder %v130, 0.0
    %vm144 = vcmp.gt.f32.partialorder %v135, 0.0
    %vm145 = vcmp.gt.f32.partialorder %v140, 0.0
    %v146 = vmul.f32 %v130, 0.01
    %v147 = vmul.f32 %v135, 0.01
    %v148 = vmul.f32 %v140, 0.01
    %v149 = vsel %vm143, %v130, %v146
    %v150 = vsel %vm144, %v135, %v147
    %v151 = vsel %vm145, %v140, %v148
    %v152 = vld [vmem:[%s3] sm:$0xff]
    %v153 = vld [vmem:[%s3 + $0x8] sm:$0xff]
    %v154 = vld [vmem:[%s3 + $0x10] sm:$0xf]
    %v155 = vld [vmem:[%s4] sm:$0xff]
    %v156 = vld [vmem:[%s4 + $0x8] sm:$0xff]
    %v157 = vld [vmem:[%s4 + $0x10] sm:$0xf]
    %159 = vset.pattern.permute.xlu0 0
    %160 = vperm.xlu0 %159, %v155
    %v161 = vpop.permute.xlu0 %160
    %164 = vset.pattern.permute.xlu0 0
    %165 = vperm.xlu0 %164, %v156
    %v166 = vpop.permute.xlu0 %165
    %169 = vset.pattern.permute.xlu0 0
    %170 = vperm.xlu0 %169, %v157
    %v171 = vpop.permute.xlu0 %170
    %vm173 = vcmask 162816
    %v175 = vsel %vm173, %v152, 0
    %v178 = vsel %vm173, %v153, 0
    %v181 = vsel %vm173, %v154, 0
    %v184 = vsel %vm59, %v151, 0
    %186 = vmatprep.subr.mxu0 0.0
    %187 = vmatpush1.msra.mxu0 0.0
    %188 = vmatprep.subr.mxu0 0.0
    %189 = vmatpush1.msra.mxu0 0.0
    %190 = vmatprep.subr.mxu0 0.0
    %191 = vmatpush1.msra.mxu0 0.0
    %192 = vmatprep.subr.mxu0 0.0
    %193 = vmatpush1.msra.mxu0 0.0
    %194 = vmatprep.subr.mxu0 0.0
    %195 = vmatpush1.msra.mxu0 0.0
    %196 = vmatprep.subr.mxu0 0.0
    %197 = vmatpush1.msra.mxu0 0.0
    %198 = vmatprep.subr.mxu0 0.0
    %199 = vmatpush1.msra.mxu0 0.0
    %200 = vmatprep.subr.mxu0 0.0
    %201 = vmatpush1.msra.mxu0 0.0
    %202 = vmatprep.subr.mxu0 0.0
    %203 = vmatpush1.msra.mxu0 0.0
    %204 = vmatprep.subr.mxu0 0.0
    %205 = vmatpush1.msra.mxu0 0.0
    %206 = vmatprep.subr.mxu0 0.0
    %207 = vmatpush1.msra.mxu0 0.0
    %208 = vmatprep.subr.mxu0 0.0
    %209 = vmatpush1.msra.mxu0 0.0
    %210 = vmatprep.subr.mxu0 0.0
    %211 = vmatpush1.msra.mxu0 0.0
    %212 = vmatprep.subr.mxu0 0.0
    %213 = vmatpush1.msra.mxu0 %v184
    %214 = vmatprep.subr.mxu0 0.0
    %215 = vmatpush1.msra.mxu0 %v150
    %216 = vmatprep.subr.mxu0 0.0
    %217 = vmatpush1.msra.mxu0 %v149
    %218 = vmatprep.subr.mxu0 0.0
    %219 = vmatpush2.msra.mxu0 0.0
    %220 = vmatprep.subr.mxu0 0.0
    %221 = vmatpush2.msra.mxu0 0.0
    %222 = vmatprep.subr.mxu0 0.0
    %223 = vmatpush2.msra.mxu0 0.0
    %224 = vmatprep.subr.mxu0 0.0
    %225 = vmatpush2.msra.mxu0 0.0
    %226 = vmatprep.subr.mxu0 0.0
    %227 = vmatpush2.msra.mxu0 0.0
    %228 = vmatprep.subr.mxu0 0.0
    %229 = vmatpush2.msra.mxu0 0.0
    %230 = vmatprep.subr.mxu0 0.0
    %231 = vmatpush2.msra.mxu0 0.0
    %232 = vmatprep.subr.mxu0 0.0
    %233 = vmatpush2.msra.mxu0 0.0
    %234 = vmatprep.subr.mxu0 0.0
    %235 = vmatpush2.msra.mxu0 0.0
    %236 = vmatprep.subr.mxu0 0.0
    %237 = vmatpush2.msra.mxu0 0.0
    %238 = vmatprep.subr.mxu0 0.0
    %239 = vmatpush2.msra.mxu0 0.0
    %240 = vmatprep.subr.mxu0 0.0
    %241 = vmatpush2.msra.mxu0 0.0
    %242 = vmatprep.subr.mxu0 0.0
    %243 = vmatpush2.msra.mxu0 0.0
    %244 = vmatprep.subr.mxu0 0.0
    %245 = vmatpush2.msra.mxu0 0.0
    %246 = vmatprep.subr.mxu0 0.0
    %247 = vmatpush2.msra.mxu0 0.0
    %248 = vmatprep.subr.mxu0 0.0
    %249 = vmatpush2.msra.mxu0 0.0
    %250 = vmatprep.mubr.f32.mxu0 0.0
    %251 = vmatmul.mubr.f32.gmra.mxu0 %v175
    %v252 = vpop.f32.mrf.mxu0
    %v253 = vadd.f32 %v161, %v252
    %v254 = vpop.f32.mrf.mxu0
    %255 = vmatprep.mubr.f32.mxu0 0.0
    %256 = vmatmul.mubr.f32.gmra.mxu0 %v178
    %v257 = vpop.f32.mrf.mxu0
    %v258 = vadd.f32 %v166, %v257
    %v259 = vpop.f32.mrf.mxu0
    %260 = vmatprep.mubr.f32.mxu0 0.0
    %261 = vmatmul.mubr.f32.gmra.mxu0 %v181
    %v262 = vpop.f32.mrf.mxu0
    %v263 = vadd.f32 %v171, %v262
    %v264 = vpop.f32.mrf.mxu0
    %265 = vdwg.mxu0
    %vm266 = vcmp.gt.f32.partialorder %v253, 0.0
    %vm267 = vcmp.gt.f32.partialorder %v258, 0.0
    %vm268 = vcmp.gt.f32.partialorder %v263, 0.0
    %v269 = vmul.f32 %v253, 0.01
    %v270 = vmul.f32 %v258, 0.01
    %v271 = vmul.f32 %v263, 0.01
    %v272 = vsel %vm266, %v253, %v269
    %v273 = vsel %vm267, %v258, %v270
    %v274 = vsel %vm268, %v263, %v271
    %v275 = vld [vmem:[%s5] sm:$0x3]
    %v276 = vld [vmem:[%s6] sm:$0x3]
    %278 = vset.pattern.permute.xlu0 0
    %279 = vperm.xlu0 %278, %v276
    %v280 = vpop.permute.xlu0 %279
    %v283 = vsel %vm173, %v275, 0
    %v286 = vsel %vm59, %v274, 0
    %288 = vmatprep.subr.mxu0 0.0
    %289 = vmatpush1.msra.mxu0 0.0
    %290 = vmatprep.subr.mxu0 0.0
    %291 = vmatpush1.msra.mxu0 0.0
    %292 = vmatprep.subr.mxu0 0.0
    %293 = vmatpush1.msra.mxu0 0.0
    %294 = vmatprep.subr.mxu0 0.0
    %295 = vmatpush1.msra.mxu0 0.0
    %296 = vmatprep.subr.mxu0 0.0
    %297 = vmatpush1.msra.mxu0 0.0
    %298 = vmatprep.subr.mxu0 0.0
    %299 = vmatpush1.msra.mxu0 0.0
    %300 = vmatprep.subr.mxu0 0.0
    %301 = vmatpush1.msra.mxu0 0.0
    %302 = vmatprep.subr.mxu0 0.0
    %303 = vmatpush1.msra.mxu0 0.0
    %304 = vmatprep.subr.mxu0 0.0
    %305 = vmatpush1.msra.mxu0 0.0
    %306 = vmatprep.subr.mxu0 0.0
    %307 = vmatpush1.msra.mxu0 0.0
    %308 = vmatprep.subr.mxu0 0.0
    %309 = vmatpush1.msra.mxu0 0.0
    %310 = vmatprep.subr.mxu0 0.0
    %311 = vmatpush1.msra.mxu0 0.0
    %312 = vmatprep.subr.mxu0 0.0
    %313 = vmatpush1.msra.mxu0 0.0
    %314 = vmatprep.subr.mxu0 0.0
    %315 = vmatpush1.msra.mxu0 %v286
    %316 = vmatprep.subr.mxu0 0.0
    %317 = vmatpush1.msra.mxu0 %v273
    %318 = vmatprep.subr.mxu0 0.0
    %319 = vmatpush1.msra.mxu0 %v272
    %320 = vmatprep.subr.mxu0 0.0
    %321 = vmatpush2.msra.mxu0 0.0
    %322 = vmatprep.subr.mxu0 0.0
    %323 = vmatpush2.msra.mxu0 0.0
    %324 = vmatprep.subr.mxu0 0.0
    %325 = vmatpush2.msra.mxu0 0.0
    %326 = vmatprep.subr.mxu0 0.0
    %327 = vmatpush2.msra.mxu0 0.0
    %328 = vmatprep.subr.mxu0 0.0
    %329 = vmatpush2.msra.mxu0 0.0
    %330 = vmatprep.subr.mxu0 0.0
    %331 = vmatpush2.msra.mxu0 0.0
    %332 = vmatprep.subr.mxu0 0.0
    %333 = vmatpush2.msra.mxu0 0.0
    %334 = vmatprep.subr.mxu0 0.0
    %335 = vmatpush2.msra.mxu0 0.0
    %336 = vmatprep.subr.mxu0 0.0
    %337 = vmatpush2.msra.mxu0 0.0
    %338 = vmatprep.subr.mxu0 0.0
    %339 = vmatpush2.msra.mxu0 0.0
    %340 = vmatprep.subr.mxu0 0.0
    %341 = vmatpush2.msra.mxu0 0.0
    %342 = vmatprep.subr.mxu0 0.0
    %343 = vmatpush2.msra.mxu0 0.0
    %344 = vmatprep.subr.mxu0 0.0
    %345 = vmatpush2.msra.mxu0 0.0
    %346 = vmatprep.subr.mxu0 0.0
    %347 = vmatpush2.msra.mxu0 0.0
    %348 = vmatprep.subr.mxu0 0.0
    %349 = vmatpush2.msra.mxu0 0.0
    %350 = vmatprep.subr.mxu0 0.0
    %351 = vmatpush2.msra.mxu0 0.0
    %352 = vmatprep.mubr.f32.mxu0 0.0
    %353 = vmatmul.mubr.f32.gmra.mxu0 %v283
    %v354 = vpop.f32.mrf.mxu0
    %v355 = vadd.f32 %v280, %v354
    %v356 = vpop.f32.mrf.mxu0
    %357 = vdwg.mxu0
    %358 = vst [vmem:[#allocation2] sm:$0x3] %v355
    // Predicated region
    $region30: #{tpu_custom_call.1} parent=1 // pred_check
      _
    $region31: #{tpu_custom_call.1} parent=1 // pred_check_branch
      %360 = sbr.rel (0) target = $region33
    $region32: #{tpu_custom_call.1} parent=1 // pred_region
      %s362 = ssub.s32 32, 32
      %363 = vsyncadd [#allocation3], %s362
      %s365 = sshll.u32 [#allocation2], 4
      %s366 = int_to_ptr.vmem [resolvable:$true] %s365
      %368 = dma.vmem_to_hbm [thread:$0]  %s366, 32, %s7, [#allocation3]
    $region33: #{tpu_custom_call.1} parent=1 // pred_fallthru
      _
    // Predicated region
    $region34: #{tpu_custom_call.1} parent=1 // pred_check
      _
    $region35: #{tpu_custom_call.1} parent=1 // pred_check_branch
      %370 = sbr.rel (0) target = $region37
    $region36: #{tpu_custom_call.1} parent=1 // pred_region
      %371 = dma.done [#allocation3], 32
    $region37: #{tpu_custom_call.1} parent=1 // pred_fallthru
      _
    %372 = vsyncpa [#allocation3], 1

</llo_original>
